<compile_context>
chip_gen: v7x
topology: tpu7x:2x2x1
jax: 0.10.0
libtpu: 0.0.40
codegen_flags: <defaults>
</compile_context>

<pallas_src>
import functools

import jax
import jax.numpy as jnp
from jax.experimental import pallas as pl
from jax.experimental.pallas import tpu as pltpu


# ----------------------------------------------------------------------------
# Fused Pallas kernel: bilinear resize + 5x5 conv + BatchNorm2d (batch stats)
# ----------------------------------------------------------------------------
def upsample_conv_bn_kernel(x_ref, a_ref, c_ref, pool_ref, poolT_ref, gb_ref, o_ref,
                            *, eps, inv_count, kh_taps, n_ho):
    """Single-step fused kernel.

    x_ref     : (N*Hi, WiCin_pad)            rows=(n,hi), lanes=(wi,ci) zero-padded to 128k
    a_ref     : (KH*N*Ho, N*Hi)              stacked kh-shifted block-diag H-resize matrices
    c_ref     : (KH*WiCin_pad, Wo*Cout)      fused [W-resize x conv-tap] weights, K-stacked
    pool_ref  : (Wo*Cout, Cout)              one-hot channel pooling ((wo,co) -> co)
    poolT_ref : (Cout, Wo*Cout)              one-hot channel broadcast (co -> (wo,co))
    gb_ref    : (2, Cout)                    gamma ; beta
    o_ref     : (N*Ho, Wo*Cout)              rows=(n,ho), lanes=(wo,co)  (lane-dense store)
    """
    # Stage 1: ONE H-resize matmul for all kh taps (K = N*Hi).
    r_all = jnp.dot(a_ref[...], x_ref[...],
                    preferred_element_type=jnp.float32)        # (KH*N*Ho, WiCin_pad)

    # kh row-blocks -> lane-blocks.  Blocks are (N*Ho, 128k): 128-lane aligned, so this
    # concat is pure vreg placement (no lane shifts, no relayout work).
    r2 = jnp.concatenate(
        [r_all[kh * n_ho:(kh + 1) * n_ho, :] for kh in range(kh_taps)],
        axis=1)                                                 # (N*Ho, KH*WiCin_pad)

    # Stage 2: ONE fused [W-resize + (kh,kw,ci) contraction] matmul (K = KH*WiCin_pad).
    acc = jnp.dot(r2, c_ref[...],
                  preferred_element_type=jnp.float32)           # (N*Ho, Wo*Cout)

    # ---- fused BatchNorm2d (training-mode biased batch statistics), 2-matmul epilogue ----
    colsum = jnp.sum(acc, axis=0, keepdims=True)                # (1, Wo*Cout)
    colsq = jnp.sum(acc * acc, axis=0, keepdims=True)           # (1, Wo*Cout)
    stats = jnp.concatenate([colsum, colsq], axis=0)            # (2, Wo*Cout)
    red = jnp.dot(stats, pool_ref[...],
                  preferred_element_type=jnp.float32)           # (2, Cout)

    mean = red[0:1, :] * inv_count                              # (1, Cout)
    # E[x^2]-E[x]^2 in f32 — fine for zero-ish-mean activations; use centered form for
    # production data with large per-channel means.
    var = red[1:2, :] * inv_count - mean * mean                 # (1, Cout)

    gb = gb_ref[...]
    scale = gb[0:1, :] * jax.lax.rsqrt(var + eps)               # (1, Cout)
    shift = gb[1:2, :] - mean * scale                           # (1, Cout)

    ss = jnp.concatenate([scale, shift], axis=0)                # (2, Cout)
    ss_row = jnp.dot(ss, poolT_ref[...],
                     preferred_element_type=jnp.float32)        # (2, Wo*Cout)

    o_ref[...] = (acc * ss_row[0:1, :] + ss_row[1:2, :]).astype(o_ref.dtype)


# ----------------------------------------------------------------------------
# Host-side helpers
# ----------------------------------------------------------------------------
def _resize_matrix(out_size, in_size):
    """1-D bilinear resize matrix, align_corners=True (matches F.interpolate)."""
    if out_size == 1:
        src = jnp.zeros((1,), jnp.float32)
    else:
        src = jnp.arange(out_size, dtype=jnp.float32) * (in_size - 1) / (out_size - 1)
    lo = jnp.clip(jnp.floor(src).astype(jnp.int32), 0, in_size - 1)
    hi = jnp.clip(lo + 1, 0, in_size - 1)
    frac = src - lo.astype(jnp.float32)
    rows = jnp.arange(out_size)
    m = jnp.zeros((out_size, in_size), jnp.float32)
    m = m.at[rows, lo].add(1.0 - frac)
    m = m.at[rows, hi].add(frac)
    return m


def build_upsample_params(w_hwio, gamma, beta, *, batch, in_hw, out_hw):
    """Weight-only folding, done ONCE at module init (hoisted out of the per-call path)."""
    Hi, Wi = in_hw
    Ho, Wo = out_hw
    KH, KW, Cin, Cout = w_hwio.shape
    ph, pw = (KH - 1) // 2, (KW - 1) // 2
    N = batch
    wic = Wi * Cin
    wic_pad = -(-wic // 128) * 128   # lane-align each per-tap r block

    # Resize matrices, zero-padded so the resized image is already the zero-padded image
    # a padding=2 conv needs.
    ah_pad = jnp.pad(_resize_matrix(Ho, Hi), ((ph, ph), (0, 0)))     # (Ho+KH-1, Hi)
    aw_pad = jnp.pad(_resize_matrix(Wo, Wi), ((pw, pw), (0, 0)))     # (Wo+KW-1, Wi)

    # kh-shifted H-resize taps, block-diagonal over batch, stacked along rows:
    #   ahn_stack[kh*(N*Ho) + n*Ho + ho, n'*Hi + hi] = delta(n,n') * ah_pad[ho+kh, hi]
    ah_taps = jnp.stack([ah_pad[kh:kh + Ho] for kh in range(KH)])    # (KH, Ho, Hi)
    ahn = jnp.einsum('pq,koh->kpoqh', jnp.eye(N, dtype=jnp.float32), ah_taps)
    ahn_stack = ahn.reshape(KH * N * Ho, N * Hi)                     # (KH*N*Ho, N*Hi)

    # Fused [W-resize x conv tap] matrices, K-stacked (zero-padded to wic_pad per tap):
    #   cmat[kh][(wi,ci),(wo,co)] = sum_kw aw_pad[wo+kw, wi] * W[kh, kw, ci, co]
    aw_taps = jnp.stack([aw_pad[kw:kw + Wo] for kw in range(KW)])    # (KW, Wo, Wi)
    cmat = jnp.einsum('kow,hkcd->hwcod', aw_taps, w_hwio.astype(jnp.float32))
    cmat = cmat.reshape(KH, wic, Wo * Cout)
    cmat_stack = jnp.pad(cmat, ((0, 0), (0, wic_pad - wic), (0, 0)))
    cmat_stack = cmat_stack.reshape(KH * wic_pad, Wo * Cout)         # (KH*wic_pad, Wo*Cout)

    # One-hot channel pooling / broadcast matrices.
    pool = jnp.tile(jnp.eye(Cout, dtype=jnp.float32), (Wo, 1))       # (Wo*Cout, Cout)
    poolT = jnp.tile(jnp.eye(Cout, dtype=jnp.float32), (1, Wo))      # (Cout, Wo*Cout)
    gb = jnp.stack([gamma, beta]).astype(jnp.float32)                # (2, Cout)

    return ahn_stack, cmat_stack, pool, poolT, gb


# ----------------------------------------------------------------------------
# Forward (per-call path: layout plumbing + one pallas_call)
# ----------------------------------------------------------------------------
@functools.partial(jax.jit, static_argnames=("size", "eps"))
def upsample_forward(x_nchw, ahn_stack, cmat_stack, pool, poolT, gb, *, size, eps=1e-5):
    # NOTE: the conv bias cancels exactly under training-mode BatchNorm, so it never
    # reaches the kernel.  (Reinstate it if eval-mode / running stats is ever used.)
    N, Cin, Hi, Wi = x_nchw.shape
    Ho, Wo = size
    Cout = gb.shape[1]
    n_ho = N * Ho
    kh_taps = ahn_stack.shape[0] // n_ho
    wic_pad = cmat_stack.shape[0] // kh_taps

    # NCHW -> rows=(n,hi), lanes=(wi,ci), zero-padded to wic_pad lanes.
    # TODO(synk): if the surrounding model keeps NHWC activations, these transposes vanish.
    x2 = jnp.transpose(x_nchw, (0, 2, 3, 1)).reshape(N * Hi, Wi * Cin).astype(jnp.float32)
    x2p = jnp.pad(x2, ((0, 0), (0, wic_pad - Wi * Cin)))

    kernel = functools.partial(
        upsample_conv_bn_kernel,
        eps=float(eps),
        inv_count=1.0 / float(N * Ho * Wo),
        kh_taps=kh_taps,
        n_ho=n_ho)

    vmem = pl.BlockSpec(memory_space=pltpu.MemorySpace.VMEM)
    out2d = pl.pallas_call(
        kernel,
        out_shape=jax.ShapeDtypeStruct((n_ho, Wo * Cout), jnp.float32),
        in_specs=[vmem, vmem, vmem, vmem, vmem, vmem],
        out_specs=vmem,
    )(x2p, ahn_stack, cmat_stack, pool, poolT, gb)

    # rows=(n,ho), lanes=(wo,co)  ->  NCHW
    return jnp.transpose(out2d.reshape(N, Ho, Wo, Cout), (0, 3, 1, 2))


# ----------------------------------------------------------------------------
# Pure-JAX reference (for correctness check)
# ----------------------------------------------------------------------------
def reference_forward(x_nchw, size, w_hwio, bias, gamma, beta, eps=1e-5):
    Ho, Wo = size
    ah = _resize_matrix(Ho, x_nchw.shape[2])
    aw = _resize_matrix(Wo, x_nchw.shape[3])
    r = jnp.einsum('oh,nchw->ncow', ah, x_nchw)
    r = jnp.einsum('pw,ncow->ncop', aw, r)               # (N, Cin, Ho, Wo)
    w_oihw = jnp.transpose(w_hwio, (3, 2, 0, 1))
    y = jax.lax.conv_general_dilated(
        r, w_oihw, (1, 1), ((2, 2), (2, 2)),
        dimension_numbers=('NCHW', 'OIHW', 'NCHW'))
    y = y + bias[None, :, None, None]
    mean = y.mean(axis=(0, 2, 3), keepdims=True)
    var = y.var(axis=(0, 2, 3), keepdims=True)
    return ((y - mean) / jnp.sqrt(var + eps)) * gamma[None, :, None, None] \
        + beta[None, :, None, None]


# ----------------------------------------------------------------------------
if __name__ == "__main__":
    key = jax.random.PRNGKey(0)
    N, Cin, Hi, Wi = 2, 4, 16, 16          # input x (NCHW)
    Cout = 8                                # planes
    size = (32, 32)                         # target spatial size

    k1, k2, k3 = jax.random.split(key, 3)
    x = jax.random.normal(k1, (N, Cin, Hi, Wi), jnp.float32)

    # Deterministic parameter init (Conv2d default-style uniform bounds).
    fan_in = Cin * 5 * 5
    bound = 1.0 / (fan_in ** 0.5)
    w_hwio = jax.random.uniform(k2, (5, 5, Cin, Cout), jnp.float32, -bound, bound)
    bias = jax.random.uniform(k3, (Cout,), jnp.float32, -bound, bound)
    gamma = jnp.ones((Cout,), jnp.float32)   # BatchNorm2d weight init
    beta = jnp.zeros((Cout,), jnp.float32)   # BatchNorm2d bias init

    # ---- module init: fold weights ONCE (hoisted out of the per-call path) ----
    params = build_upsample_params(w_hwio, gamma, beta,
                                   batch=N, in_hw=(Hi, Wi), out_hw=size)
    params = jax.block_until_ready(params)

    # ---- forward ----
    out = upsample_forward(x, *params, size=size)
    out = jax.block_until_ready(out)

    ref = reference_forward(x, size, w_hwio, bias, gamma, beta)
    assert out.shape == (N, Cout, size[0], size[1]), out.shape
    err = float(jnp.max(jnp.abs(out - ref)))
    assert err < 1e-3, f"max abs err {err}"

    print("KERNEL_OK")
</pallas_src>

<mosaic_0001>
module attributes {stable_mosaic.version = 11 : i64} {
  func.func @upsample_conv_bn_kernel(%arg0: memref<32x128xf32, #tpu.memory_space<vmem>>, %arg1: memref<320x32xf32, #tpu.memory_space<vmem>>, %arg2: memref<640x256xf32, #tpu.memory_space<vmem>>, %arg3: memref<256x8xf32, #tpu.memory_space<vmem>>, %arg4: memref<8x256xf32, #tpu.memory_space<vmem>>, %arg5: memref<2x8xf32, #tpu.memory_space<vmem>>, %arg6: memref<64x256xf32, #tpu.memory_space<vmem>>) attributes {dimension_semantics = [], scalar_prefetch = 0 : i64, scratch_operands = 0 : i64, tpu.core_type = #tpu.core_type<tc>} {
    %c0 = arith.constant 0 : index
    %c0_0 = arith.constant 0 : index
    %0 = vector.load %arg1[%c0, %c0_0] : memref<320x32xf32, #tpu.memory_space<vmem>>, vector<320x32xf32>
    %c0_1 = arith.constant 0 : index
    %c0_2 = arith.constant 0 : index
    %1 = vector.load %arg0[%c0_1, %c0_2] : memref<32x128xf32, #tpu.memory_space<vmem>>, vector<32x128xf32>
    %cst = arith.constant dense<0.000000e+00> : vector<320x128xf32>
    %2 = tpu.matmul %0, %1, %cst {dimension_numbers = #tpu.dot_dimension_numbers<[1], [0], [0], [1], [0, 0, 1, 1], [], []>} : vector<320x32xf32>, vector<32x128xf32>, vector<320x128xf32> -> vector<320x128xf32>
    %3 = vector.extract_strided_slice %2 {offsets = [0, 0], sizes = [64, 128], strides = [1, 1]} : vector<320x128xf32> to vector<64x128xf32>
    %4 = vector.extract_strided_slice %2 {offsets = [64, 0], sizes = [64, 128], strides = [1, 1]} : vector<320x128xf32> to vector<64x128xf32>
    %5 = vector.extract_strided_slice %2 {offsets = [128, 0], sizes = [64, 128], strides = [1, 1]} : vector<320x128xf32> to vector<64x128xf32>
    %6 = vector.extract_strided_slice %2 {offsets = [192, 0], sizes = [64, 128], strides = [1, 1]} : vector<320x128xf32> to vector<64x128xf32>
    %7 = vector.extract_strided_slice %2 {offsets = [256, 0], sizes = [64, 128], strides = [1, 1]} : vector<320x128xf32> to vector<64x128xf32>
    %8 = tpu.concatenate %3, %4, %5, %6, %7 in 1 : vector<64x128xf32>, vector<64x128xf32>, vector<64x128xf32>, vector<64x128xf32>, vector<64x128xf32> -> vector<64x640xf32>
    %c0_3 = arith.constant 0 : index
    %c0_4 = arith.constant 0 : index
    %9 = vector.load %arg2[%c0_3, %c0_4] : memref<640x256xf32, #tpu.memory_space<vmem>>, vector<640x256xf32>
    %cst_5 = arith.constant dense<0.000000e+00> : vector<64x256xf32>
    %10 = tpu.matmul %8, %9, %cst_5 {dimension_numbers = #tpu.dot_dimension_numbers<[1], [0], [0], [1], [0, 0, 1, 1], [], []>} : vector<64x640xf32>, vector<640x256xf32>, vector<64x256xf32> -> vector<64x256xf32>
    %cst_6 = arith.constant dense<0.000000e+00> : vector<256xf32>
    %11 = vector.multi_reduction <add>, %10, %cst_6 [0] : vector<64x256xf32> to vector<256xf32>
    %12 = vector.shape_cast %11 : vector<256xf32> to vector<1x256xf32>
    %13 = arith.mulf %10, %10 : vector<64x256xf32>
    %cst_7 = arith.constant dense<0.000000e+00> : vector<256xf32>
    %14 = vector.multi_reduction <add>, %13, %cst_7 [0] : vector<64x256xf32> to vector<256xf32>
    %15 = vector.shape_cast %14 : vector<256xf32> to vector<1x256xf32>
    %16 = tpu.concatenate %12, %15 in 0 : vector<1x256xf32>, vector<1x256xf32> -> vector<2x256xf32>
    %c0_8 = arith.constant 0 : index
    %c0_9 = arith.constant 0 : index
    %17 = vector.load %arg3[%c0_8, %c0_9] : memref<256x8xf32, #tpu.memory_space<vmem>>, vector<256x8xf32>
    %cst_10 = arith.constant dense<0.000000e+00> : vector<2x8xf32>
    %18 = tpu.matmul %16, %17, %cst_10 {dimension_numbers = #tpu.dot_dimension_numbers<[1], [0], [0], [1], [0, 0, 1, 1], [], []>} : vector<2x256xf32>, vector<256x8xf32>, vector<2x8xf32> -> vector<2x8xf32>
    %19 = vector.extract_strided_slice %18 {offsets = [0, 0], sizes = [1, 8], strides = [1, 1]} : vector<2x8xf32> to vector<1x8xf32>
    %cst_11 = arith.constant 4.8828125E-4 : f32
    %20 = vector.broadcast %cst_11 : f32 to vector<1x8xf32>
    %21 = arith.mulf %19, %20 : vector<1x8xf32>
    %22 = vector.extract_strided_slice %18 {offsets = [1, 0], sizes = [1, 8], strides = [1, 1]} : vector<2x8xf32> to vector<1x8xf32>
    %cst_12 = arith.constant 4.8828125E-4 : f32
    %23 = vector.broadcast %cst_12 : f32 to vector<1x8xf32>
    %24 = arith.mulf %22, %23 : vector<1x8xf32>
    %25 = arith.mulf %21, %21 : vector<1x8xf32>
    %26 = arith.subf %24, %25 : vector<1x8xf32>
    %c0_13 = arith.constant 0 : index
    %c0_14 = arith.constant 0 : index
    %27 = vector.load %arg5[%c0_13, %c0_14] : memref<2x8xf32, #tpu.memory_space<vmem>>, vector<2x8xf32>
    %28 = vector.extract_strided_slice %27 {offsets = [0, 0], sizes = [1, 8], strides = [1, 1]} : vector<2x8xf32> to vector<1x8xf32>
    %cst_15 = arith.constant 9.99999974E-6 : f32
    %29 = vector.broadcast %cst_15 : f32 to vector<1x8xf32>
    %30 = arith.addf %26, %29 : vector<1x8xf32>
    %31 = math.rsqrt %30 : vector<1x8xf32>
    %32 = arith.mulf %28, %31 : vector<1x8xf32>
    %33 = vector.extract_strided_slice %27 {offsets = [1, 0], sizes = [1, 8], strides = [1, 1]} : vector<2x8xf32> to vector<1x8xf32>
    %34 = arith.mulf %21, %32 : vector<1x8xf32>
    %35 = arith.subf %33, %34 : vector<1x8xf32>
    %36 = tpu.concatenate %32, %35 in 0 : vector<1x8xf32>, vector<1x8xf32> -> vector<2x8xf32>
    %c0_16 = arith.constant 0 : index
    %c0_17 = arith.constant 0 : index
    %37 = vector.load %arg4[%c0_16, %c0_17] : memref<8x256xf32, #tpu.memory_space<vmem>>, vector<8x256xf32>
    %cst_18 = arith.constant dense<0.000000e+00> : vector<2x256xf32>
    %38 = tpu.matmul %36, %37, %cst_18 {dimension_numbers = #tpu.dot_dimension_numbers<[1], [0], [0], [1], [0, 0, 1, 1], [], []>} : vector<2x8xf32>, vector<8x256xf32>, vector<2x256xf32> -> vector<2x256xf32>
    %39 = vector.extract_strided_slice %38 {offsets = [0, 0], sizes = [1, 256], strides = [1, 1]} : vector<2x256xf32> to vector<1x256xf32>
    %40 = vector.broadcast %39 : vector<1x256xf32> to vector<64x256xf32>
    %41 = arith.mulf %10, %40 : vector<64x256xf32>
    %42 = vector.extract_strided_slice %38 {offsets = [1, 0], sizes = [1, 256], strides = [1, 1]} : vector<2x256xf32> to vector<1x256xf32>
    %43 = vector.broadcast %42 : vector<1x256xf32> to vector<64x256xf32>
    %44 = arith.addf %41, %43 : vector<64x256xf32>
    %c0_19 = arith.constant 0 : index
    %c0_20 = arith.constant 0 : index
    %45 = vector.load %arg6[%c0_19, %c0_20] : memref<64x256xf32, #tpu.memory_space<vmem>>, vector<64x256xf32>
    tpu.vector_store %arg6[%c0_19, %c0_20], %44 {strides = array<i32>} : memref<64x256xf32, #tpu.memory_space<vmem>>, vector<64x256xf32>,
    return
  }
}

</mosaic_0001>

<llo_original>
// kernel: upsample_forward.1
$region0: #{upsample_forward.1}
  #allocation0 [shape = 'u32[]', space=smem, size = 0x4, offset = 0x4, fixed_abs, tag = 'smem constant byte address 0x4 - core index']
  #allocation1 [shape = 'u32[144,128]{1,0:T(1,128)}', space=vmem, size = 0x12000, scoped, tag = 'internal scratch']
  %s0 = inlined_call_operand.vmem [shape: f32[32,128], index: 0, kind: input, shape index: {}]
  %s1 = inlined_call_operand.vmem [shape: f32[320,32], index: 1, kind: input, shape index: {}]
  %s2 = inlined_call_operand.vmem [shape: f32[640,256], index: 2, kind: input, shape index: {}]
  %s3 = inlined_call_operand.vmem [shape: f32[256,8], index: 3, kind: input, shape index: {}]
  %s4 = inlined_call_operand.vmem [shape: f32[8,256], index: 4, kind: input, shape index: {}]
  %s5 = inlined_call_operand.hbm [shape: f32[2,8], index: 5, kind: input, shape index: {}]
  %s6 = inlined_call_operand.vmem [shape: f32[64,256], index: 6, kind: output, shape index: {}]
  %s7 = sld [smem:[#allocation0]]
  $region38: #{upsample_forward.1} parent=0
    _
  %s9 = ssub.s32 1, %s7
  %s10 = scalar_select 0, %s9, %s7
  $region1: #{upsample_forward.1} parent=0
    #allocation2 [shape = 'u8[1024]{0}', space=vmem, size = 0x400, scoped, tag = 'input window, operand 5, single buffered']
    #allocation3 [shape = 's32[1]{0}', space=sflag, size = 0x4, scoped, tag = 'scoped memory for upsample_forward.1']
    %11 = vsyncpa [#allocation3], 0
    // Predicated region
    $region2: #{upsample_forward.1} parent=1 // pred_check
      _
    $region3: #{upsample_forward.1} parent=1 // pred_check_branch
      %13 = sbr.rel (0) target = $region5
    $region4: #{upsample_forward.1} parent=1 // pred_region
      _
    $region5: #{upsample_forward.1} parent=1 // pred_fallthru
      _
    // Predicated region
    $region6: #{upsample_forward.1} parent=1 // pred_check
      _
    $region7: #{upsample_forward.1} parent=1 // pred_check_branch
      %15 = sbr.rel (0) target = $region9
    $region8: #{upsample_forward.1} parent=1 // pred_region
      _
    $region9: #{upsample_forward.1} parent=1 // pred_fallthru
      _
    // Predicated region
    $region10: #{upsample_forward.1} parent=1 // pred_check
      _
    $region11: #{upsample_forward.1} parent=1 // pred_check_branch
      %17 = sbr.rel (0) target = $region13
    $region12: #{upsample_forward.1} parent=1 // pred_region
      _
    $region13: #{upsample_forward.1} parent=1 // pred_fallthru
      _
    // Predicated region
    $region14: #{upsample_forward.1} parent=1 // pred_check
      _
    $region15: #{upsample_forward.1} parent=1 // pred_check_branch
      %19 = sbr.rel (0) target = $region17
    $region16: #{upsample_forward.1} parent=1 // pred_region
      _
    $region17: #{upsample_forward.1} parent=1 // pred_fallthru
      _
    // Predicated region
    $region18: #{upsample_forward.1} parent=1 // pred_check
      _
    $region19: #{upsample_forward.1} parent=1 // pred_check_branch
      %21 = sbr.rel (0) target = $region21
    $region20: #{upsample_forward.1} parent=1 // pred_region
      _
    $region21: #{upsample_forward.1} parent=1 // pred_fallthru
      _
    // Predicated region
    $region22: #{upsample_forward.1} parent=1 // pred_check
      _
    $region23: #{upsample_forward.1} parent=1 // pred_check_branch
      %23 = sbr.rel (0) target = $region25
    $region24: #{upsample_forward.1} parent=1 // pred_region
      %s25 = ssub.s32 32, 32
      %26 = vsyncadd [#allocation3], %s25
      %s28 = sshll.u32 [#allocation2], 4
      %s29 = int_to_ptr.vmem [resolvable:$true] %s28
      %31 = dma.hbm_to_vmem [thread:$0]  %s5, 32, %s29, [#allocation3]
    $region25: #{upsample_forward.1} parent=1 // pred_fallthru
      _
    // Predicated region
    $region26: #{upsample_forward.1} parent=1 // pred_check
      _
    $region27: #{upsample_forward.1} parent=1 // pred_check_branch
      %33 = sbr.rel (0) target = $region29
    $region28: #{upsample_forward.1} parent=1 // pred_region
      %34 = dma.done [#allocation3], 32
    $region29: #{upsample_forward.1} parent=1 // pred_fallthru
      _
    %v35 = vld [vmem:[%s1] sm:$0xff]
    %v36 = vld [vmem:[%s1 + $0x8] sm:$0xff]
    %v37 = vld [vmem:[%s1 + $0x10] sm:$0xff]
    %v38 = vld [vmem:[%s1 + $0x18] sm:$0xff]
    %v39 = vld [vmem:[%s1 + $0x20] sm:$0xff]
    %v40 = vld [vmem:[%s1 + $0x28] sm:$0xff]
    %v41 = vld [vmem:[%s1 + $0x30] sm:$0xff]
    %v42 = vld [vmem:[%s1 + $0x38] sm:$0xff]
    %v43 = vld [vmem:[%s1 + $0x40] sm:$0xff]
    %v44 = vld [vmem:[%s1 + $0x48] sm:$0xff]
    %v45 = vld [vmem:[%s1 + $0x50] sm:$0xff]
    %v46 = vld [vmem:[%s1 + $0x58] sm:$0xff]
    %v47 = vld [vmem:[%s1 + $0x60] sm:$0xff]
    %v48 = vld [vmem:[%s1 + $0x68] sm:$0xff]
    %v49 = vld [vmem:[%s1 + $0x70] sm:$0xff]
    %v50 = vld [vmem:[%s1 + $0x78] sm:$0xff]
    %v51 = vld [vmem:[%s1 + $0x80] sm:$0xff]
    %v52 = vld [vmem:[%s1 + $0x88] sm:$0xff]
    %v53 = vld [vmem:[%s1 + $0x90] sm:$0xff]
    %v54 = vld [vmem:[%s1 + $0x98] sm:$0xff]
    %v55 = vld [vmem:[%s1 + $0xa0] sm:$0xff]
    %v56 = vld [vmem:[%s1 + $0xa8] sm:$0xff]
    %v57 = vld [vmem:[%s1 + $0xb0] sm:$0xff]
    %v58 = vld [vmem:[%s1 + $0xb8] sm:$0xff]
    %v59 = vld [vmem:[%s1 + $0xc0] sm:$0xff]
    %v60 = vld [vmem:[%s1 + $0xc8] sm:$0xff]
    %v61 = vld [vmem:[%s1 + $0xd0] sm:$0xff]
    %v62 = vld [vmem:[%s1 + $0xd8] sm:$0xff]
    %v63 = vld [vmem:[%s1 + $0xe0] sm:$0xff]
    %v64 = vld [vmem:[%s1 + $0xe8] sm:$0xff]
    %v65 = vld [vmem:[%s1 + $0xf0] sm:$0xff]
    %v66 = vld [vmem:[%s1 + $0xf8] sm:$0xff]
    %v67 = vld [vmem:[%s1 + $0x100] sm:$0xff]
    %v68 = vld [vmem:[%s1 + $0x108] sm:$0xff]
    %v69 = vld [vmem:[%s1 + $0x110] sm:$0xff]
    %v70 = vld [vmem:[%s1 + $0x118] sm:$0xff]
    %v71 = vld [vmem:[%s1 + $0x120] sm:$0xff]
    %v72 = vld [vmem:[%s1 + $0x128] sm:$0xff]
    %v73 = vld [vmem:[%s1 + $0x130] sm:$0xff]
    %v74 = vld [vmem:[%s1 + $0x138] sm:$0xff]
    %v75 = vld [vmem:[%s0] sm:$0xff]
    %v76 = vld [vmem:[%s0 + $0x8] sm:$0xff]
    %v77 = vld [vmem:[%s0 + $0x10] sm:$0xff]
    %v78 = vld [vmem:[%s0 + $0x18] sm:$0xff]
    %vm79 = vcmask 261120
    %v81 = vsel %vm79, %v35, 0
    %v84 = vsel %vm79, %v36, 0
    %v87 = vsel %vm79, %v37, 0
    %v90 = vsel %vm79, %v38, 0
    %v93 = vsel %vm79, %v39, 0
    %v96 = vsel %vm79, %v40, 0
    %v99 = vsel %vm79, %v41, 0
    %v102 = vsel %vm79, %v42, 0
    %v105 = vsel %vm79, %v43, 0
    %v108 = vsel %vm79, %v44, 0
    %v111 = vsel %vm79, %v45, 0
    %v114 = vsel %vm79, %v46, 0
    %v117 = vsel %vm79, %v47, 0
    %v120 = vsel %vm79, %v48, 0
    %v123 = vsel %vm79, %v49, 0
    %v126 = vsel %vm79, %v50, 0
    %v129 = vsel %vm79, %v51, 0
    %v132 = vsel %vm79, %v52, 0
    %v135 = vsel %vm79, %v53, 0
    %v138 = vsel %vm79, %v54, 0
    %v141 = vsel %vm79, %v55, 0
    %v144 = vsel %vm79, %v56, 0
    %v147 = vsel %vm79, %v57, 0
    %v150 = vsel %vm79, %v58, 0
    %v153 = vsel %vm79, %v59, 0
    %v156 = vsel %vm79, %v60, 0
    %v159 = vsel %vm79, %v61, 0
    %v162 = vsel %vm79, %v62, 0
    %v165 = vsel %vm79, %v63, 0
    %v168 = vsel %vm79, %v64, 0
    %v171 = vsel %vm79, %v65, 0
    %v174 = vsel %vm79, %v66, 0
    %v177 = vsel %vm79, %v67, 0
    %v180 = vsel %vm79, %v68, 0
    %v183 = vsel %vm79, %v69, 0
    %v186 = vsel %vm79, %v70, 0
    %v189 = vsel %vm79, %v71, 0
    %v192 = vsel %vm79, %v72, 0
    %v195 = vsel %vm79, %v73, 0
    %v198 = vsel %vm79, %v74, 0
    %200 = vmatprep.subr.mxu0 0.0
    %201 = vmatpush1.msra.mxu0 %v75
    %202 = vmatprep.subr.mxu0 0.0
    %203 = vmatpush1.msra.mxu0 %v76
    %204 = vmatprep.subr.mxu0 0.0
    %205 = vmatpush1.msra.mxu0 %v77
    %206 = vmatprep.subr.mxu0 0.0
    %207 = vmatpush1.msra.mxu0 %v78
    %208 = vmatprep.subr.mxu0 0.0
    %209 = vmatpush1.msra.mxu0 0.0
    %210 = vmatprep.subr.mxu0 0.0
    %211 = vmatpush1.msra.mxu0 0.0
    %212 = vmatprep.subr.mxu0 0.0
    %213 = vmatpush1.msra.mxu0 0.0
    %214 = vmatprep.subr.mxu0 0.0
    %215 = vmatpush1.msra.mxu0 0.0
    %216 = vmatprep.subr.mxu0 0.0
    %217 = vmatpush1.msra.mxu0 0.0
    %218 = vmatprep.subr.mxu0 0.0
    %219 = vmatpush1.msra.mxu0 0.0
    %220 = vmatprep.subr.mxu0 0.0
    %221 = vmatpush1.msra.mxu0 0.0
    %222 = vmatprep.subr.mxu0 0.0
    %223 = vmatpush1.msra.mxu0 0.0
    %224 = vmatprep.subr.mxu0 0.0
    %225 = vmatpush1.msra.mxu0 0.0
    %226 = vmatprep.subr.mxu0 0.0
    %227 = vmatpush1.msra.mxu0 0.0
    %228 = vmatprep.subr.mxu0 0.0
    %229 = vmatpush1.msra.mxu0 0.0
    %230 = vmatprep.subr.mxu0 0.0
    %231 = vmatpush1.msra.mxu0 0.0
    %232 = vmatprep.subr.mxu0 0.0
    %233 = vmatpush1.msra.mxu0 0.0
    %234 = vmatprep.subr.mxu0 0.0
    %235 = vmatpush1.msra.mxu0 0.0
    %236 = vmatprep.subr.mxu0 0.0
    %237 = vmatpush1.msra.mxu0 0.0
    %238 = vmatprep.subr.mxu0 0.0
    %239 = vmatpush1.msra.mxu0 0.0
    %240 = vmatprep.subr.mxu0 0.0
    %241 = vmatpush1.msra.mxu0 0.0
    %242 = vmatprep.subr.mxu0 0.0
    %243 = vmatpush1.msra.mxu0 0.0
    %244 = vmatprep.subr.mxu0 0.0
    %245 = vmatpush1.msra.mxu0 0.0
    %246 = vmatprep.subr.mxu0 0.0
    %247 = vmatpush1.msra.mxu0 0.0
    %248 = vmatprep.subr.mxu0 0.0
    %249 = vmatpush1.msra.mxu0 0.0
    %250 = vmatprep.subr.mxu0 0.0
    %251 = vmatpush1.msra.mxu0 0.0
    %252 = vmatprep.subr.mxu0 0.0
    %253 = vmatpush1.msra.mxu0 0.0
    %254 = vmatprep.subr.mxu0 0.0
    %255 = vmatpush1.msra.mxu0 0.0
    %256 = vmatprep.subr.mxu0 0.0
    %257 = vmatpush1.msra.mxu0 0.0
    %258 = vmatprep.subr.mxu0 0.0
    %259 = vmatpush1.msra.mxu0 0.0
    %260 = vmatprep.subr.mxu0 0.0
    %261 = vmatpush1.msra.mxu0 0.0
    %262 = vmatprep.subr.mxu0 0.0
    %263 = vmatpush1.msra.mxu0 0.0
    %264 = vmatprep.mubr.f32.mxu0 0.0
    %265 = vmatmul.mubr.f32.gmra.mrb[0].mxu0 %v81
    %v266 = vpop.f32.mrb[0].mxu0
    %v267 = vadd.f32 0.0, %v266
    %v268 = vpop.f32.mrb[0].mxu0
    %269 = vmatprep.mubr.f32.mxu0 0.0
    %270 = vmatmul.mubr.f32.gmra.mrb[0].mxu0 %v84
    %v271 = vpop.f32.mrb[0].mxu0
    %v272 = vadd.f32 0.0, %v271
    %v273 = vpop.f32.mrb[0].mxu0
    %274 = vmatprep.mubr.f32.mxu0 0.0
    %275 = vmatmul.mubr.f32.gmra.mrb[0].mxu0 %v87
    %v276 = vpop.f32.mrb[0].mxu0
    %v277 = vadd.f32 0.0, %v276
    %v278 = vpop.f32.mrb[0].mxu0
    %279 = vmatprep.mubr.f32.mxu0 0.0
    %280 = vmatmul.mubr.f32.gmra.mrb[0].mxu0 %v90
    %v281 = vpop.f32.mrb[0].mxu0
    %v282 = vadd.f32 0.0, %v281
    %v283 = vpop.f32.mrb[0].mxu0
    %284 = vmatprep.mubr.f32.mxu0 0.0
    %285 = vmatmul.mubr.f32.gmra.mrb[0].mxu0 %v93
    %v286 = vpop.f32.mrb[0].mxu0
    %v287 = vadd.f32 0.0, %v286
    %v288 = vpop.f32.mrb[0].mxu0
    %289 = vmatprep.mubr.f32.mxu0 0.0
    %290 = vmatmul.mubr.f32.gmra.mrb[0].mxu0 %v96
    %v291 = vpop.f32.mrb[0].mxu0
    %v292 = vadd.f32 0.0, %v291
    %v293 = vpop.f32.mrb[0].mxu0
    %294 = vmatprep.mubr.f32.mxu0 0.0
    %295 = vmatmul.mubr.f32.gmra.mrb[0].mxu0 %v99
    %v296 = vpop.f32.mrb[0].mxu0
    %v297 = vadd.f32 0.0, %v296
    %v298 = vpop.f32.mrb[0].mxu0
    %299 = vmatprep.mubr.f32.mxu0 0.0
    %300 = vmatmul.mubr.f32.gmra.mrb[0].mxu0 %v102
    %v301 = vpop.f32.mrb[0].mxu0
    %v302 = vadd.f32 0.0, %v301
    %v303 = vpop.f32.mrb[0].mxu0
    %304 = vmatprep.mubr.f32.mxu0 0.0
    %305 = vmatmul.mubr.f32.gmra.mrb[0].mxu0 %v105
    %v306 = vpop.f32.mrb[0].mxu0
    %v307 = vadd.f32 0.0, %v306
    %v308 = vpop.f32.mrb[0].mxu0
    %309 = vmatprep.mubr.f32.mxu0 0.0
    %310 = vmatmul.mubr.f32.gmra.mrb[0].mxu0 %v108
    %v311 = vpop.f32.mrb[0].mxu0
    %v312 = vadd.f32 0.0, %v311
    %v313 = vpop.f32.mrb[0].mxu0
    %314 = vmatprep.mubr.f32.mxu0 0.0
    %315 = vmatmul.mubr.f32.gmra.mrb[0].mxu0 %v111
    %v316 = vpop.f32.mrb[0].mxu0
    %v317 = vadd.f32 0.0, %v316
    %v318 = vpop.f32.mrb[0].mxu0
    %319 = vmatprep.mubr.f32.mxu0 0.0
    %320 = vmatmul.mubr.f32.gmra.mrb[0].mxu0 %v114
    %v321 = vpop.f32.mrb[0].mxu0
    %v322 = vadd.f32 0.0, %v321
    %v323 = vpop.f32.mrb[0].mxu0
    %324 = vmatprep.mubr.f32.mxu0 0.0
    %325 = vmatmul.mubr.f32.gmra.mrb[0].mxu0 %v117
    %v326 = vpop.f32.mrb[0].mxu0
    %v327 = vadd.f32 0.0, %v326
    %v328 = vpop.f32.mrb[0].mxu0
    %329 = vmatprep.mubr.f32.mxu0 0.0
    %330 = vmatmul.mubr.f32.gmra.mrb[0].mxu0 %v120
    %v331 = vpop.f32.mrb[0].mxu0
    %v332 = vadd.f32 0.0, %v331
    %v333 = vpop.f32.mrb[0].mxu0
    %334 = vmatprep.mubr.f32.mxu0 0.0
    %335 = vmatmul.mubr.f32.gmra.mrb[0].mxu0 %v123
    %v336 = vpop.f32.mrb[0].mxu0
    %v337 = vadd.f32 0.0, %v336
    %v338 = vpop.f32.mrb[0].mxu0
    %339 = vmatprep.mubr.f32.mxu0 0.0
    %340 = vmatmul.mubr.f32.gmra.mrb[0].mxu0 %v126
    %v341 = vpop.f32.mrb[0].mxu0
    %v342 = vadd.f32 0.0, %v341
    %v343 = vpop.f32.mrb[0].mxu0
    %344 = vmatprep.mubr.f32.mxu0 0.0
    %345 = vmatmul.mubr.f32.gmra.mrb[0].mxu0 %v129
    %v346 = vpop.f32.mrb[0].mxu0
    %v347 = vadd.f32 0.0, %v346
    %v348 = vpop.f32.mrb[0].mxu0
    %349 = vmatprep.mubr.f32.mxu0 0.0
    %350 = vmatmul.mubr.f32.gmra.mrb[0].mxu0 %v132
    %v351 = vpop.f32.mrb[0].mxu0
    %v352 = vadd.f32 0.0, %v351
    %v353 = vpop.f32.mrb[0].mxu0
    %354 = vmatprep.mubr.f32.mxu0 0.0
    %355 = vmatmul.mubr.f32.gmra.mrb[0].mxu0 %v135
    %v356 = vpop.f32.mrb[0].mxu0
    %v357 = vadd.f32 0.0, %v356
    %v358 = vpop.f32.mrb[0].mxu0
    %359 = vmatprep.mubr.f32.mxu0 0.0
    %360 = vmatmul.mubr.f32.gmra.mrb[0].mxu0 %v138
    %v361 = vpop.f32.mrb[0].mxu0
    %v362 = vadd.f32 0.0, %v361
    %v363 = vpop.f32.mrb[0].mxu0
    %364 = vmatprep.mubr.f32.mxu0 0.0
    %365 = vmatmul.mubr.f32.gmra.mrb[0].mxu0 %v141
    %v366 = vpop.f32.mrb[0].mxu0
    %v367 = vadd.f32 0.0, %v366
    %v368 = vpop.f32.mrb[0].mxu0
    %369 = vmatprep.mubr.f32.mxu0 0.0
    %370 = vmatmul.mubr.f32.gmra.mrb[0].mxu0 %v144
    %v371 = vpop.f32.mrb[0].mxu0
    %v372 = vadd.f32 0.0, %v371
    %v373 = vpop.f32.mrb[0].mxu0
    %374 = vmatprep.mubr.f32.mxu0 0.0
    %375 = vmatmul.mubr.f32.gmra.mrb[0].mxu0 %v147
    %v376 = vpop.f32.mrb[0].mxu0
    %v377 = vadd.f32 0.0, %v376
    %v378 = vpop.f32.mrb[0].mxu0
    %379 = vmatprep.mubr.f32.mxu0 0.0
    %380 = vmatmul.mubr.f32.gmra.mrb[0].mxu0 %v150
    %v381 = vpop.f32.mrb[0].mxu0
    %v382 = vadd.f32 0.0, %v381
    %v383 = vpop.f32.mrb[0].mxu0
    %384 = vmatprep.mubr.f32.mxu0 0.0
    %385 = vmatmul.mubr.f32.gmra.mrb[0].mxu0 %v153
    %v386 = vpop.f32.mrb[0].mxu0
    %v387 = vadd.f32 0.0, %v386
    %v388 = vpop.f32.mrb[0].mxu0
    %389 = vmatprep.mubr.f32.mxu0 0.0
    %390 = vmatmul.mubr.f32.gmra.mrb[0].mxu0 %v156
    %v391 = vpop.f32.mrb[0].mxu0
    %v392 = vadd.f32 0.0, %v391
    %v393 = vpop.f32.mrb[0].mxu0
    %394 = vmatprep.mubr.f32.mxu0 0.0
    %395 = vmatmul.mubr.f32.gmra.mrb[0].mxu0 %v159
    %v396 = vpop.f32.mrb[0].mxu0
    %v397 = vadd.f32 0.0, %v396
    %v398 = vpop.f32.mrb[0].mxu0
    %399 = vmatprep.mubr.f32.mxu0 0.0
    %400 = vmatmul.mubr.f32.gmra.mrb[0].mxu0 %v162
    %v401 = vpop.f32.mrb[0].mxu0
    %v402 = vadd.f32 0.0, %v401
    %v403 = vpop.f32.mrb[0].mxu0
    %404 = vmatprep.mubr.f32.mxu0 0.0
    %405 = vmatmul.mubr.f32.gmra.mrb[0].mxu0 %v165
    %v406 = vpop.f32.mrb[0].mxu0
    %v407 = vadd.f32 0.0, %v406
    %v408 = vpop.f32.mrb[0].mxu0
    %409 = vmatprep.mubr.f32.mxu0 0.0
    %410 = vmatmul.mubr.f32.gmra.mrb[0].mxu0 %v168
    %v411 = vpop.f32.mrb[0].mxu0
    %v412 = vadd.f32 0.0, %v411
    %v413 = vpop.f32.mrb[0].mxu0
    %414 = vmatprep.mubr.f32.mxu0 0.0
    %415 = vmatmul.mubr.f32.gmra.mrb[0].mxu0 %v171
    %v416 = vpop.f32.mrb[0].mxu0
    %v417 = vadd.f32 0.0, %v416
    %v418 = vpop.f32.mrb[0].mxu0
    %419 = vmatprep.mubr.f32.mxu0 0.0
    %420 = vmatmul.mubr.f32.gmra.mrb[0].mxu0 %v174
    %v421 = vpop.f32.mrb[0].mxu0
    %v422 = vadd.f32 0.0, %v421
    %v423 = vpop.f32.mrb[0].mxu0
    %424 = vmatprep.mubr.f32.mxu0 0.0
    %425 = vmatmul.mubr.f32.gmra.mrb[0].mxu0 %v177
    %v426 = vpop.f32.mrb[0].mxu0
    %v427 = vadd.f32 0.0, %v426
    %v428 = vpop.f32.mrb[0].mxu0
    %429 = vmatprep.mubr.f32.mxu0 0.0
    %430 = vmatmul.mubr.f32.gmra.mrb[0].mxu0 %v180
    %v431 = vpop.f32.mrb[0].mxu0
    %v432 = vadd.f32 0.0, %v431
    %v433 = vpop.f32.mrb[0].mxu0
    %434 = vmatprep.mubr.f32.mxu0 0.0
    %435 = vmatmul.mubr.f32.gmra.mrb[0].mxu0 %v183
    %v436 = vpop.f32.mrb[0].mxu0
    %v437 = vadd.f32 0.0, %v436
    %v438 = vpop.f32.mrb[0].mxu0
    %439 = vmatprep.mubr.f32.mxu0 0.0
    %440 = vmatmul.mubr.f32.gmra.mrb[0].mxu0 %v186
    %v441 = vpop.f32.mrb[0].mxu0
    %v442 = vadd.f32 0.0, %v441
    %v443 = vpop.f32.mrb[0].mxu0
    %444 = vmatprep.mubr.f32.mxu0 0.0
    %445 = vmatmul.mubr.f32.gmra.mrb[0].mxu0 %v189
    %v446 = vpop.f32.mrb[0].mxu0
    %v447 = vadd.f32 0.0, %v446
    %v448 = vpop.f32.mrb[0].mxu0
    %449 = vmatprep.mubr.f32.mxu0 0.0
    %450 = vmatmul.mubr.f32.gmra.mrb[0].mxu0 %v192
    %v451 = vpop.f32.mrb[0].mxu0
    %v452 = vadd.f32 0.0, %v451
    %v453 = vpop.f32.mrb[0].mxu0
    %454 = vmatprep.mubr.f32.mxu0 0.0
    %455 = vmatmul.mubr.f32.gmra.mrb[0].mxu0 %v195
    %v456 = vpop.f32.mrb[0].mxu0
    %v457 = vadd.f32 0.0, %v456
    %v458 = vpop.f32.mrb[0].mxu0
    %459 = vmatprep.mubr.f32.mxu0 0.0
    %460 = vmatmul.mubr.f32.gmra.mrb[0].mxu0 %v198
    %v461 = vpop.f32.mrb[0].mxu0
    %v462 = vadd.f32 0.0, %v461
    %v463 = vpop.f32.mrb[0].mxu0
    %464 = vdwg.mxu0
    %v465 = vld [vmem:[%s2] sm:$0xff]
    %v466 = vld [vmem:[%s2 + $0x8] sm:$0xff]
    %v467 = vld [vmem:[%s2 + $0x10] sm:$0xff]
    %v468 = vld [vmem:[%s2 + $0x18] sm:$0xff]
    %v469 = vld [vmem:[%s2 + $0x20] sm:$0xff]
    %v470 = vld [vmem:[%s2 + $0x28] sm:$0xff]
    %v471 = vld [vmem:[%s2 + $0x30] sm:$0xff]
    %v472 = vld [vmem:[%s2 + $0x38] sm:$0xff]
    %v473 = vld [vmem:[%s2 + $0x40] sm:$0xff]
    %v474 = vld [vmem:[%s2 + $0x48] sm:$0xff]
    %v475 = vld [vmem:[%s2 + $0x50] sm:$0xff]
    %v476 = vld [vmem:[%s2 + $0x58] sm:$0xff]
    %v477 = vld [vmem:[%s2 + $0x60] sm:$0xff]
    %v478 = vld [vmem:[%s2 + $0x68] sm:$0xff]
    %v479 = vld [vmem:[%s2 + $0x70] sm:$0xff]
    %v480 = vld [vmem:[%s2 + $0x78] sm:$0xff]
    %v481 = vld [vmem:[%s2 + $0x80] sm:$0xff]
    %v482 = vld [vmem:[%s2 + $0x88] sm:$0xff]
    %v483 = vld [vmem:[%s2 + $0x90] sm:$0xff]
    %v484 = vld [vmem:[%s2 + $0x98] sm:$0xff]
    %v485 = vld [vmem:[%s2 + $0xa0] sm:$0xff]
    %v486 = vld [vmem:[%s2 + $0xa8] sm:$0xff]
    %v487 = vld [vmem:[%s2 + $0xb0] sm:$0xff]
    %v488 = vld [vmem:[%s2 + $0xb8] sm:$0xff]
    %v489 = vld [vmem:[%s2 + $0xc0] sm:$0xff]
    %v490 = vld [vmem:[%s2 + $0xc8] sm:$0xff]
    %v491 = vld [vmem:[%s2 + $0xd0] sm:$0xff]
    %v492 = vld [vmem:[%s2 + $0xd8] sm:$0xff]
    %v493 = vld [vmem:[%s2 + $0xe0] sm:$0xff]
    %v494 = vld [vmem:[%s2 + $0xe8] sm:$0xff]
    %v495 = vld [vmem:[%s2 + $0xf0] sm:$0xff]
    %v496 = vld [vmem:[%s2 + $0xf8] sm:$0xff]
    %v497 = vld [vmem:[%s2 + $0x100] sm:$0xff]
    %v498 = vld [vmem:[%s2 + $0x108] sm:$0xff]
    %v499 = vld [vmem:[%s2 + $0x110] sm:$0xff]
    %v500 = vld [vmem:[%s2 + $0x118] sm:$0xff]
    %v501 = vld [vmem:[%s2 + $0x120] sm:$0xff]
    %v502 = vld [vmem:[%s2 + $0x128] sm:$0xff]
    %v503 = vld [vmem:[%s2 + $0x130] sm:$0xff]
    %v504 = vld [vmem:[%s2 + $0x138] sm:$0xff]
    %v505 = vld [vmem:[%s2 + $0x140] sm:$0xff]
    %v506 = vld [vmem:[%s2 + $0x148] sm:$0xff]
    %v507 = vld [vmem:[%s2 + $0x150] sm:$0xff]
    %v508 = vld [vmem:[%s2 + $0x158] sm:$0xff]
    %v509 = vld [vmem:[%s2 + $0x160] sm:$0xff]
    %v510 = vld [vmem:[%s2 + $0x168] sm:$0xff]
    %v511 = vld [vmem:[%s2 + $0x170] sm:$0xff]
    %v512 = vld [vmem:[%s2 + $0x178] sm:$0xff]
    %v513 = vld [vmem:[%s2 + $0x180] sm:$0xff]
    %v514 = vld [vmem:[%s2 + $0x188] sm:$0xff]
    %v515 = vld [vmem:[%s2 + $0x190] sm:$0xff]
    %v516 = vld [vmem:[%s2 + $0x198] sm:$0xff]
    %v517 = vld [vmem:[%s2 + $0x1a0] sm:$0xff]
    %v518 = vld [vmem:[%s2 + $0x1a8] sm:$0xff]
    %v519 = vld [vmem:[%s2 + $0x1b0] sm:$0xff]
    %v520 = vld [vmem:[%s2 + $0x1b8] sm:$0xff]
    %v521 = vld [vmem:[%s2 + $0x1c0] sm:$0xff]
    %v522 = vld [vmem:[%s2 + $0x1c8] sm:$0xff]
    %v523 = vld [vmem:[%s2 + $0x1d0] sm:$0xff]
    %v524 = vld [vmem:[%s2 + $0x1d8] sm:$0xff]
    %v525 = vld [vmem:[%s2 + $0x1e0] sm:$0xff]
    %v526 = vld [vmem:[%s2 + $0x1e8] sm:$0xff]
    %v527 = vld [vmem:[%s2 + $0x1f0] sm:$0xff]
    %v528 = vld [vmem:[%s2 + $0x1f8] sm:$0xff]
    %v529 = vld [vmem:[%s2 + $0x200] sm:$0xff]
    %v530 = vld [vmem:[%s2 + $0x208] sm:$0xff]
    %v531 = vld [vmem:[%s2 + $0x210] sm:$0xff]
    %v532 = vld [vmem:[%s2 + $0x218] sm:$0xff]
    %v533 = vld [vmem:[%s2 + $0x220] sm:$0xff]
    %v534 = vld [vmem:[%s2 + $0x228] sm:$0xff]
    %v535 = vld [vmem:[%s2 + $0x230] sm:$0xff]
    %v536 = vld [vmem:[%s2 + $0x238] sm:$0xff]
    %v537 = vld [vmem:[%s2 + $0x240] sm:$0xff]
    %v538 = vld [vmem:[%s2 + $0x248] sm:$0xff]
    %v539 = vld [vmem:[%s2 + $0x250] sm:$0xff]
    %v540 = vld [vmem:[%s2 + $0x258] sm:$0xff]
    %v541 = vld [vmem:[%s2 + $0x260] sm:$0xff]
    %v542 = vld [vmem:[%s2 + $0x268] sm:$0xff]
    %v543 = vld [vmem:[%s2 + $0x270] sm:$0xff]
    %v544 = vld [vmem:[%s2 + $0x278] sm:$0xff]
    %v545 = vld [vmem:[%s2 + $0x280] sm:$0xff]
    %v546 = vld [vmem:[%s2 + $0x288] sm:$0xff]
    %v547 = vld [vmem:[%s2 + $0x290] sm:$0xff]
    %v548 = vld [vmem:[%s2 + $0x298] sm:$0xff]
    %v549 = vld [vmem:[%s2 + $0x2a0] sm:$0xff]
    %v550 = vld [vmem:[%s2 + $0x2a8] sm:$0xff]
    %v551 = vld [vmem:[%s2 + $0x2b0] sm:$0xff]
    %v552 = vld [vmem:[%s2 + $0x2b8] sm:$0xff]
    %v553 = vld [vmem:[%s2 + $0x2c0] sm:$0xff]
    %v554 = vld [vmem:[%s2 + $0x2c8] sm:$0xff]
    %v555 = vld [vmem:[%s2 + $0x2d0] sm:$0xff]
    %v556 = vld [vmem:[%s2 + $0x2d8] sm:$0xff]
    %v557 = vld [vmem:[%s2 + $0x2e0] sm:$0xff]
    %v558 = vld [vmem:[%s2 + $0x2e8] sm:$0xff]
    %v559 = vld [vmem:[%s2 + $0x2f0] sm:$0xff]
    %v560 = vld [vmem:[%s2 + $0x2f8] sm:$0xff]
    %v561 = vld [vmem:[%s2 + $0x300] sm:$0xff]
    %v562 = vld [vmem:[%s2 + $0x308] sm:$0xff]
    %v563 = vld [vmem:[%s2 + $0x310] sm:$0xff]
    %v564 = vld [vmem:[%s2 + $0x318] sm:$0xff]
    %v565 = vld [vmem:[%s2 + $0x320] sm:$0xff]
    %v566 = vld [vmem:[%s2 + $0x328] sm:$0xff]
    %v567 = vld [vmem:[%s2 + $0x330] sm:$0xff]
    %v568 = vld [vmem:[%s2 + $0x338] sm:$0xff]
    %v569 = vld [vmem:[%s2 + $0x340] sm:$0xff]
    %v570 = vld [vmem:[%s2 + $0x348] sm:$0xff]
    %v571 = vld [vmem:[%s2 + $0x350] sm:$0xff]
    %v572 = vld [vmem:[%s2 + $0x358] sm:$0xff]
    %v573 = vld [vmem:[%s2 + $0x360] sm:$0xff]
    %v574 = vld [vmem:[%s2 + $0x368] sm:$0xff]
    %v575 = vld [vmem:[%s2 + $0x370] sm:$0xff]
    %v576 = vld [vmem:[%s2 + $0x378] sm:$0xff]
    %v577 = vld [vmem:[%s2 + $0x380] sm:$0xff]
    %v578 = vld [vmem:[%s2 + $0x388] sm:$0xff]
    %v579 = vld [vmem:[%s2 + $0x390] sm:$0xff]
    %v580 = vld [vmem:[%s2 + $0x398] sm:$0xff]
    %v581 = vld [vmem:[%s2 + $0x3a0] sm:$0xff]
    %v582 = vld [vmem:[%s2 + $0x3a8] sm:$0xff]
    %v583 = vld [vmem:[%s2 + $0x3b0] sm:$0xff]
    %v584 = vld [vmem:[%s2 + $0x3b8] sm:$0xff]
    %v585 = vld [vmem:[%s2 + $0x3c0] sm:$0xff]
    %v586 = vld [vmem:[%s2 + $0x3c8] sm:$0xff]
    %v587 = vld [vmem:[%s2 + $0x3d0] sm:$0xff]
    %v588 = vld [vmem:[%s2 + $0x3d8] sm:$0xff]
    %v589 = vld [vmem:[%s2 + $0x3e0] sm:$0xff]
    %v590 = vld [vmem:[%s2 + $0x3e8] sm:$0xff]
    %v591 = vld [vmem:[%s2 + $0x3f0] sm:$0xff]
    %v592 = vld [vmem:[%s2 + $0x3f8] sm:$0xff]
    %v593 = vld [vmem:[%s2 + $0x400] sm:$0xff]
    %v594 = vld [vmem:[%s2 + $0x408] sm:$0xff]
    %v595 = vld [vmem:[%s2 + $0x410] sm:$0xff]
    %v596 = vld [vmem:[%s2 + $0x418] sm:$0xff]
    %v597 = vld [vmem:[%s2 + $0x420] sm:$0xff]
    %v598 = vld [vmem:[%s2 + $0x428] sm:$0xff]
    %v599 = vld [vmem:[%s2 + $0x430] sm:$0xff]
    %v600 = vld [vmem:[%s2 + $0x438] sm:$0xff]
    %v601 = vld [vmem:[%s2 + $0x440] sm:$0xff]
    %v602 = vld [vmem:[%s2 + $0x448] sm:$0xff]
    %v603 = vld [vmem:[%s2 + $0x450] sm:$0xff]
    %v604 = vld [vmem:[%s2 + $0x458] sm:$0xff]
    %v605 = vld [vmem:[%s2 + $0x460] sm:$0xff]
    %v606 = vld [vmem:[%s2 + $0x468] sm:$0xff]
    %v607 = vld [vmem:[%s2 + $0x470] sm:$0xff]
    %v608 = vld [vmem:[%s2 + $0x478] sm:$0xff]
    %v609 = vld [vmem:[%s2 + $0x480] sm:$0xff]
    %v610 = vld [vmem:[%s2 + $0x488] sm:$0xff]
    %v611 = vld [vmem:[%s2 + $0x490] sm:$0xff]
    %v612 = vld [vmem:[%s2 + $0x498] sm:$0xff]
    %v613 = vld [vmem:[%s2 + $0x4a0] sm:$0xff]
    %v614 = vld [vmem:[%s2 + $0x4a8] sm:$0xff]
    %v615 = vld [vmem:[%s2 + $0x4b0] sm:$0xff]
    %v616 = vld [vmem:[%s2 + $0x4b8] sm:$0xff]
    %v617 = vld [vmem:[%s2 + $0x4c0] sm:$0xff]
    %v618 = vld [vmem:[%s2 + $0x4c8] sm:$0xff]
    %v619 = vld [vmem:[%s2 + $0x4d0] sm:$0xff]
    %v620 = vld [vmem:[%s2 + $0x4d8] sm:$0xff]
    %v621 = vld [vmem:[%s2 + $0x4e0] sm:$0xff]
    %v622 = vld [vmem:[%s2 + $0x4e8] sm:$0xff]
    %v623 = vld [vmem:[%s2 + $0x4f0] sm:$0xff]
    %v624 = vld [vmem:[%s2 + $0x4f8] sm:$0xff]
    %625 = vmatprep.subr.mxu0 %v466
    %626 = vmatpush1.msra.mxu0 %v465
    %627 = vmatprep.subr.mxu0 %v468
    %628 = vmatpush1.msra.mxu0 %v467
    %629 = vmatprep.subr.mxu0 %v470
    %630 = vmatpush1.msra.mxu0 %v469
    %631 = vmatprep.subr.mxu0 %v472
    %632 = vmatpush1.msra.mxu0 %v471
    %633 = vmatprep.subr.mxu0 %v474
    %634 = vmatpush1.msra.mxu0 %v473
    %635 = vmatprep.subr.mxu0 %v476
    %636 = vmatpush1.msra.mxu0 %v475
    %637 = vmatprep.subr.mxu0 %v478
    %638 = vmatpush1.msra.mxu0 %v477
    %639 = vmatprep.subr.mxu0 %v480
    %640 = vmatpush1.msra.mxu0 %v479
    %641 = vmatprep.subr.mxu0 %v482
    %642 = vmatpush1.msra.mxu0 %v481
    %643 = vmatprep.subr.mxu0 %v484
    %644 = vmatpush1.msra.mxu0 %v483
    %645 = vmatprep.subr.mxu0 %v486
    %646 = vmatpush1.msra.mxu0 %v485
    %647 = vmatprep.subr.mxu0 %v488
    %648 = vmatpush1.msra.mxu0 %v487
    %649 = vmatprep.subr.mxu0 %v490
    %650 = vmatpush1.msra.mxu0 %v489
    %651 = vmatprep.subr.mxu0 %v492
    %652 = vmatpush1.msra.mxu0 %v491
    %653 = vmatprep.subr.mxu0 %v494
    %654 = vmatpush1.msra.mxu0 %v493
    %655 = vmatprep.subr.mxu0 %v496
    %656 = vmatpush1.msra.mxu0 %v495
    %657 = vmatprep.subr.mxu0 %v498
    %658 = vmatpush1.msra.mxu0 %v497
    %659 = vmatprep.subr.mxu0 %v500
    %660 = vmatpush1.msra.mxu0 %v499
    %661 = vmatprep.subr.mxu0 %v502
    %662 = vmatpush1.msra.mxu0 %v501
    %663 = vmatprep.subr.mxu0 %v504
    %664 = vmatpush1.msra.mxu0 %v503
    %665 = vmatprep.subr.mxu0 %v506
    %666 = vmatpush1.msra.mxu0 %v505
    %667 = vmatprep.subr.mxu0 %v508
    %668 = vmatpush1.msra.mxu0 %v507
    %669 = vmatprep.subr.mxu0 %v510
    %670 = vmatpush1.msra.mxu0 %v509
    %671 = vmatprep.subr.mxu0 %v512
    %672 = vmatpush1.msra.mxu0 %v511
    %673 = vmatprep.subr.mxu0 %v514
    %674 = vmatpush1.msra.mxu0 %v513
    %675 = vmatprep.subr.mxu0 %v516
    %676 = vmatpush1.msra.mxu0 %v515
    %677 = vmatprep.subr.mxu0 %v518
    %678 = vmatpush1.msra.mxu0 %v517
    %679 = vmatprep.subr.mxu0 %v520
    %680 = vmatpush1.msra.mxu0 %v519
    %681 = vmatprep.subr.mxu0 %v522
    %682 = vmatpush1.msra.mxu0 %v521
    %683 = vmatprep.subr.mxu0 %v524
    %684 = vmatpush1.msra.mxu0 %v523
    %685 = vmatprep.subr.mxu0 %v526
    %686 = vmatpush1.msra.mxu0 %v525
    %687 = vmatprep.subr.mxu0 %v528
    %688 = vmatpush1.msra.mxu0 %v527
    %689 = vmatprep.mubr.f32.mxu0 %v307
    %690 = vmatmul.mubr.f32.gmra.mrb[0].mxu0 %v267
    %v691 = vpop.f32.mrb[0].mxu0
    %v692 = vadd.f32 0.0, %v691
    %v693 = vpop.f32.mrb[0].mxu0
    %v694 = vadd.f32 0.0, %v693
    %695 = vmatprep.mubr.f32.mxu0 %v312
    %696 = vmatmul.mubr.f32.gmra.mrb[0].mxu0 %v272
    %v697 = vpop.f32.mrb[0].mxu0
    %v698 = vadd.f32 0.0, %v697
    %v699 = vpop.f32.mrb[0].mxu0
    %v700 = vadd.f32 0.0, %v699
    %701 = vmatprep.mubr.f32.mxu0 %v317
    %702 = vmatmul.mubr.f32.gmra.mrb[0].mxu0 %v277
    %v703 = vpop.f32.mrb[0].mxu0
    %v704 = vadd.f32 0.0, %v703
    %v705 = vpop.f32.mrb[0].mxu0
    %v706 = vadd.f32 0.0, %v705
    %707 = vmatprep.mubr.f32.mxu0 %v322
    %708 = vmatmul.mubr.f32.gmra.mrb[0].mxu0 %v282
    %v709 = vpop.f32.mrb[0].mxu0
    %v710 = vadd.f32 0.0, %v709
    %v711 = vpop.f32.mrb[0].mxu0
    %v712 = vadd.f32 0.0, %v711
    %713 = vmatprep.mubr.f32.mxu0 %v327
    %714 = vmatmul.mubr.f32.gmra.mrb[0].mxu0 %v287
    %v715 = vpop.f32.mrb[0].mxu0
    %v716 = vadd.f32 0.0, %v715
    %v717 = vpop.f32.mrb[0].mxu0
    %v718 = vadd.f32 0.0, %v717
    %719 = vmatprep.mubr.f32.mxu0 %v332
    %720 = vmatmul.mubr.f32.gmra.mrb[0].mxu0 %v292
    %v721 = vpop.f32.mrb[0].mxu0
    %v722 = vadd.f32 0.0, %v721
    %v723 = vpop.f32.mrb[0].mxu0
    %v724 = vadd.f32 0.0, %v723
    %725 = vmatprep.mubr.f32.mxu0 %v337
    %726 = vmatmul.mubr.f32.gmra.mrb[0].mxu0 %v297
    %v727 = vpop.f32.mrb[0].mxu0
    %v728 = vadd.f32 0.0, %v727
    %v729 = vpop.f32.mrb[0].mxu0
    %v730 = vadd.f32 0.0, %v729
    %731 = vmatprep.mubr.f32.mxu0 %v342
    %732 = vmatmul.mubr.f32.gmra.mrb[0].mxu0 %v302
    %v733 = vpop.f32.mrb[0].mxu0
    %v734 = vadd.f32 0.0, %v733
    %v735 = vpop.f32.mrb[0].mxu0
    %v736 = vadd.f32 0.0, %v735
    %737 = vdwg.mxu0
    %738 = vmatprep.subr.mxu0 %v530
    %739 = vmatpush1.msra.mxu0 %v529
    %740 = vmatprep.subr.mxu0 %v532
    %741 = vmatpush1.msra.mxu0 %v531
    %742 = vmatprep.subr.mxu0 %v534
    %743 = vmatpush1.msra.mxu0 %v533
    %744 = vmatprep.subr.mxu0 %v536
    %745 = vmatpush1.msra.mxu0 %v535
    %746 = vmatprep.subr.mxu0 %v538
    %747 = vmatpush1.msra.mxu0 %v537
    %748 = vmatprep.subr.mxu0 %v540
    %749 = vmatpush1.msra.mxu0 %v539
    %750 = vmatprep.subr.mxu0 %v542
    %751 = vmatpush1.msra.mxu0 %v541
    %752 = vmatprep.subr.mxu0 %v544
    %753 = vmatpush1.msra.mxu0 %v543
    %754 = vmatprep.subr.mxu0 %v546
    %755 = vmatpush1.msra.mxu0 %v545
    %756 = vmatprep.subr.mxu0 %v548
    %757 = vmatpush1.msra.mxu0 %v547
    %758 = vmatprep.subr.mxu0 %v550
    %759 = vmatpush1.msra.mxu0 %v549
    %760 = vmatprep.subr.mxu0 %v552
    %761 = vmatpush1.msra.mxu0 %v551
    %762 = vmatprep.subr.mxu0 %v554
    %763 = vmatpush1.msra.mxu0 %v553
    %764 = vmatprep.subr.mxu0 %v556
    %765 = vmatpush1.msra.mxu0 %v555
    %766 = vmatprep.subr.mxu0 %v558
    %767 = vmatpush1.msra.mxu0 %v557
    %768 = vmatprep.subr.mxu0 %v560
    %769 = vmatpush1.msra.mxu0 %v559
    %770 = vmatprep.subr.mxu0 %v562
    %771 = vmatpush1.msra.mxu0 %v561
    %772 = vmatprep.subr.mxu0 %v564
    %773 = vmatpush1.msra.mxu0 %v563
    %774 = vmatprep.subr.mxu0 %v566
    %775 = vmatpush1.msra.mxu0 %v565
    %776 = vmatprep.subr.mxu0 %v568
    %777 = vmatpush1.msra.mxu0 %v567
    %778 = vmatprep.subr.mxu0 %v570
    %779 = vmatpush1.msra.mxu0 %v569
    %780 = vmatprep.subr.mxu0 %v572
    %781 = vmatpush1.msra.mxu0 %v571
    %782 = vmatprep.subr.mxu0 %v574
    %783 = vmatpush1.msra.mxu0 %v573
    %784 = vmatprep.subr.mxu0 %v576
    %785 = vmatpush1.msra.mxu0 %v575
    %786 = vmatprep.subr.mxu0 %v578
    %787 = vmatpush1.msra.mxu0 %v577
    %788 = vmatprep.subr.mxu0 %v580
    %789 = vmatpush1.msra.mxu0 %v579
    %790 = vmatprep.subr.mxu0 %v582
    %791 = vmatpush1.msra.mxu0 %v581
    %792 = vmatprep.subr.mxu0 %v584
    %793 = vmatpush1.msra.mxu0 %v583
    %794 = vmatprep.subr.mxu0 %v586
    %795 = vmatpush1.msra.mxu0 %v585
    %796 = vmatprep.subr.mxu0 %v588
    %797 = vmatpush1.msra.mxu0 %v587
    %798 = vmatprep.subr.mxu0 %v590
    %799 = vmatpush1.msra.mxu0 %v589
    %800 = vmatprep.subr.mxu0 %v592
    %801 = vmatpush1.msra.mxu0 %v591
    %802 = vmatprep.mubr.f32.mxu0 %v387
    %803 = vmatmul.mubr.f32.gmra.mrb[0].mxu0 %v347
    %v804 = vpop.f32.mrb[0].mxu0
    %v805 = vadd.f32 %v692, %v804
    %v806 = vpop.f32.mrb[0].mxu0
    %v807 = vadd.f32 %v694, %v806
    %808 = vmatprep.mubr.f32.mxu0 %v392
    %809 = vmatmul.mubr.f32.gmra.mrb[0].mxu0 %v352
    %v810 = vpop.f32.mrb[0].mxu0
    %v811 = vadd.f32 %v698, %v810
    %v812 = vpop.f32.mrb[0].mxu0
    %v813 = vadd.f32 %v700, %v812
    %814 = vmatprep.mubr.f32.mxu0 %v397
    %815 = vmatmul.mubr.f32.gmra.mrb[0].mxu0 %v357
    %v816 = vpop.f32.mrb[0].mxu0
    %v817 = vadd.f32 %v704, %v816
    %v818 = vpop.f32.mrb[0].mxu0
    %v819 = vadd.f32 %v706, %v818
    %820 = vmatprep.mubr.f32.mxu0 %v402
    %821 = vmatmul.mubr.f32.gmra.mrb[0].mxu0 %v362
    %v822 = vpop.f32.mrb[0].mxu0
    %v823 = vadd.f32 %v710, %v822
    %v824 = vpop.f32.mrb[0].mxu0
    %v825 = vadd.f32 %v712, %v824
    %826 = vmatprep.mubr.f32.mxu0 %v407
    %827 = vmatmul.mubr.f32.gmra.mrb[0].mxu0 %v367
    %v828 = vpop.f32.mrb[0].mxu0
    %v829 = vadd.f32 %v716, %v828
    %v830 = vpop.f32.mrb[0].mxu0
    %v831 = vadd.f32 %v718, %v830
    %832 = vmatprep.mubr.f32.mxu0 %v412
    %833 = vmatmul.mubr.f32.gmra.mrb[0].mxu0 %v372
    %v834 = vpop.f32.mrb[0].mxu0
    %v835 = vadd.f32 %v722, %v834
    %v836 = vpop.f32.mrb[0].mxu0
    %v837 = vadd.f32 %v724, %v836
    %838 = vmatprep.mubr.f32.mxu0 %v417
    %839 = vmatmul.mubr.f32.gmra.mrb[0].mxu0 %v377
    %v840 = vpop.f32.mrb[0].mxu0
    %v841 = vadd.f32 %v728, %v840
    %v842 = vpop.f32.mrb[0].mxu0
    %v843 = vadd.f32 %v730, %v842
    %844 = vmatprep.mubr.f32.mxu0 %v422
    %845 = vmatmul.mubr.f32.gmra.mrb[0].mxu0 %v382
    %v846 = vpop.f32.mrb[0].mxu0
    %v847 = vadd.f32 %v734, %v846
    %v848 = vpop.f32.mrb[0].mxu0
    %v849 = vadd.f32 %v736, %v848
    %850 = vdwg.mxu0
    %851 = vmatprep.subr.mxu0 %v594
    %852 = vmatpush1.msra.mxu0 %v593
    %853 = vmatprep.subr.mxu0 %v596
    %854 = vmatpush1.msra.mxu0 %v595
    %855 = vmatprep.subr.mxu0 %v598
    %856 = vmatpush1.msra.mxu0 %v597
    %857 = vmatprep.subr.mxu0 %v600
    %858 = vmatpush1.msra.mxu0 %v599
    %859 = vmatprep.subr.mxu0 %v602
    %860 = vmatpush1.msra.mxu0 %v601
    %861 = vmatprep.subr.mxu0 %v604
    %862 = vmatpush1.msra.mxu0 %v603
    %863 = vmatprep.subr.mxu0 %v606
    %864 = vmatpush1.msra.mxu0 %v605
    %865 = vmatprep.subr.mxu0 %v608
    %866 = vmatpush1.msra.mxu0 %v607
    %867 = vmatprep.subr.mxu0 %v610
    %868 = vmatpush1.msra.mxu0 %v609
    %869 = vmatprep.subr.mxu0 %v612
    %870 = vmatpush1.msra.mxu0 %v611
    %871 = vmatprep.subr.mxu0 %v614
    %872 = vmatpush1.msra.mxu0 %v613
    %873 = vmatprep.subr.mxu0 %v616
    %874 = vmatpush1.msra.mxu0 %v615
    %875 = vmatprep.subr.mxu0 %v618
    %876 = vmatpush1.msra.mxu0 %v617
    %877 = vmatprep.subr.mxu0 %v620
    %878 = vmatpush1.msra.mxu0 %v619
    %879 = vmatprep.subr.mxu0 %v622
    %880 = vmatpush1.msra.mxu0 %v621
    %881 = vmatprep.subr.mxu0 %v624
    %882 = vmatpush1.msra.mxu0 %v623
    %883 = vmatprep.subr.mxu0 0.0
    %884 = vmatpush1.msra.mxu0 0.0
    %885 = vmatprep.subr.mxu0 0.0
    %886 = vmatpush1.msra.mxu0 0.0
    %887 = vmatprep.subr.mxu0 0.0
    %888 = vmatpush1.msra.mxu0 0.0
    %889 = vmatprep.subr.mxu0 0.0
    %890 = vmatpush1.msra.mxu0 0.0
    %891 = vmatprep.subr.mxu0 0.0
    %892 = vmatpush1.msra.mxu0 0.0
    %893 = vmatprep.subr.mxu0 0.0
    %894 = vmatpush1.msra.mxu0 0.0
    %895 = vmatprep.subr.mxu0 0.0
    %896 = vmatpush1.msra.mxu0 0.0
    %897 = vmatprep.subr.mxu0 0.0
    %898 = vmatpush1.msra.mxu0 0.0
    %899 = vmatprep.subr.mxu0 0.0
    %900 = vmatpush1.msra.mxu0 0.0
    %901 = vmatprep.subr.mxu0 0.0
    %902 = vmatpush1.msra.mxu0 0.0
    %903 = vmatprep.subr.mxu0 0.0
    %904 = vmatpush1.msra.mxu0 0.0
    %905 = vmatprep.subr.mxu0 0.0
    %906 = vmatpush1.msra.mxu0 0.0
    %907 = vmatprep.subr.mxu0 0.0
    %908 = vmatpush1.msra.mxu0 0.0
    %909 = vmatprep.subr.mxu0 0.0
    %910 = vmatpush1.msra.mxu0 0.0
    %911 = vmatprep.subr.mxu0 0.0
    %912 = vmatpush1.msra.mxu0 0.0
    %913 = vmatprep.subr.mxu0 0.0
    %914 = vmatpush1.msra.mxu0 0.0
    %915 = vmatprep.mubr.f32.mxu0 0.0
    %916 = vmatmul.mubr.f32.gmra.mrb[0].mxu0 %v427
    %v917 = vpop.f32.mrb[0].mxu0
    %v918 = vadd.f32 %v805, %v917
    %v919 = vpop.f32.mrb[0].mxu0
    %v920 = vadd.f32 %v807, %v919
    %921 = vmatprep.mubr.f32.mxu0 0.0
    %922 = vmatmul.mubr.f32.gmra.mrb[0].mxu0 %v432
    %v923 = vpop.f32.mrb[0].mxu0
    %v924 = vadd.f32 %v811, %v923
    %v925 = vpop.f32.mrb[0].mxu0
    %v926 = vadd.f32 %v813, %v925
    %927 = vmatprep.mubr.f32.mxu0 0.0
    %928 = vmatmul.mubr.f32.gmra.mrb[0].mxu0 %v437
    %v929 = vpop.f32.mrb[0].mxu0
    %v930 = vadd.f32 %v817, %v929
    %v931 = vpop.f32.mrb[0].mxu0
    %v932 = vadd.f32 %v819, %v931
    %933 = vmatprep.mubr.f32.mxu0 0.0
    %934 = vmatmul.mubr.f32.gmra.mrb[0].mxu0 %v442
    %v935 = vpop.f32.mrb[0].mxu0
    %v936 = vadd.f32 %v823, %v935
    %v937 = vpop.f32.mrb[0].mxu0
    %v938 = vadd.f32 %v825, %v937
    %939 = vmatprep.mubr.f32.mxu0 0.0
    %940 = vmatmul.mubr.f32.gmra.mrb[0].mxu0 %v447
    %v941 = vpop.f32.mrb[0].mxu0
    %v942 = vadd.f32 %v829, %v941
    %v943 = vpop.f32.mrb[0].mxu0
    %v944 = vadd.f32 %v831, %v943
    %945 = vmatprep.mubr.f32.mxu0 0.0
    %946 = vmatmul.mubr.f32.gmra.mrb[0].mxu0 %v452
    %v947 = vpop.f32.mrb[0].mxu0
    %v948 = vadd.f32 %v835, %v947
    %v949 = vpop.f32.mrb[0].mxu0
    %v950 = vadd.f32 %v837, %v949
    %951 = vmatprep.mubr.f32.mxu0 0.0
    %952 = vmatmul.mubr.f32.gmra.mrb[0].mxu0 %v457
    %v953 = vpop.f32.mrb[0].mxu0
    %v954 = vadd.f32 %v841, %v953
    %v955 = vpop.f32.mrb[0].mxu0
    %v956 = vadd.f32 %v843, %v955
    %957 = vmatprep.mubr.f32.mxu0 0.0
    %958 = vmatmul.mubr.f32.gmra.mrb[0].mxu0 %v462
    %v959 = vpop.f32.mrb[0].mxu0
    %v960 = vadd.f32 %v847, %v959
    %v961 = vpop.f32.mrb[0].mxu0
    %v962 = vadd.f32 %v849, %v961
    %963 = vdwg.mxu0
    %v964 = vadd.f32 %v918, %v924
    %v965 = vadd.f32 %v964, %v930
    %v966 = vadd.f32 %v965, %v936
    %v967 = vadd.f32 %v966, %v942
    %v968 = vadd.f32 %v967, %v948
    %v969 = vadd.f32 %v968, %v954
    %v970 = vadd.f32 %v969, %v960
    %v971 = vrot.slane %v970, 4
    %v972 = vadd.f32 %v970, %v971
    %v973 = vrot.slane %v972, 2
    %v974 = vadd.f32 %v972, %v973
    %v975 = vrot.slane %v974, 1
    %v976 = vadd.f32 %v974, %v975
    %v977 = vadd.f32 %v920, %v926
    %v978 = vadd.f32 %v977, %v932
    %v979 = vadd.f32 %v978, %v938
    %v980 = vadd.f32 %v979, %v944
    %v981 = vadd.f32 %v980, %v950
    %v982 = vadd.f32 %v981, %v956
    %v983 = vadd.f32 %v982, %v962
    %v984 = vrot.slane %v983, 4
    %v985 = vadd.f32 %v983, %v984
    %v986 = vrot.slane %v985, 2
    %v987 = vadd.f32 %v985, %v986
    %v988 = vrot.slane %v987, 1
    %v989 = vadd.f32 %v987, %v988
    %v990 = vmul.f32 %v918, %v918
    %v991 = vmul.f32 %v920, %v920
    %v992 = vmul.f32 %v924, %v924
    %v993 = vmul.f32 %v926, %v926
    %v994 = vmul.f32 %v930, %v930
    %v995 = vmul.f32 %v932, %v932
    %v996 = vmul.f32 %v936, %v936
    %v997 = vmul.f32 %v938, %v938
    %v998 = vmul.f32 %v942, %v942
    %v999 = vmul.f32 %v944, %v944
    %v1000 = vmul.f32 %v948, %v948
    %v1001 = vmul.f32 %v950, %v950
    %v1002 = vmul.f32 %v954, %v954
    %v1003 = vmul.f32 %v956, %v956
    %v1004 = vmul.f32 %v960, %v960
    %v1005 = vmul.f32 %v962, %v962
    %v1006 = vadd.f32 %v990, %v992
    %v1007 = vadd.f32 %v1006, %v994
    %v1008 = vadd.f32 %v1007, %v996
    %v1009 = vadd.f32 %v1008, %v998
    %v1010 = vadd.f32 %v1009, %v1000
    %v1011 = vadd.f32 %v1010, %v1002
    %v1012 = vadd.f32 %v1011, %v1004
    %v1013 = vrot.slane %v1012, 4
    %v1014 = vadd.f32 %v1012, %v1013
    %v1015 = vrot.slane %v1014, 2
    %v1016 = vadd.f32 %v1014, %v1015
    %v1017 = vrot.slane %v1016, 1
    %v1018 = vadd.f32 %v1016, %v1017
    %v1019 = vadd.f32 %v991, %v993
    %v1020 = vadd.f32 %v1019, %v995
    %v1021 = vadd.f32 %v1020, %v997
    %v1022 = vadd.f32 %v1021, %v999
    %v1023 = vadd.f32 %v1022, %v1001
    %v1024 = vadd.f32 %v1023, %v1003
    %v1025 = vadd.f32 %v1024, %v1005
    %v1026 = vrot.slane %v1025, 4
    %v1027 = vadd.f32 %v1025, %v1026
    %v1028 = vrot.slane %v1027, 2
    %v1029 = vadd.f32 %v1027, %v1028
    %v1030 = vrot.slane %v1029, 1
    %v1031 = vadd.f32 %v1029, %v1030
    %vm1032 = vcmask 1040384
    %v1033 = vsel %vm1032, %v976, %v1018
    %v1034 = vsel %vm1032, %v989, %v1031
    %v1035 = vld [vmem:[%s3] sm:$0xff]
    %v1036 = vld [vmem:[%s3 + $0x8] sm:$0xff]
    %v1037 = vld [vmem:[%s3 + $0x10] sm:$0xff]
    %v1038 = vld [vmem:[%s3 + $0x18] sm:$0xff]
    %v1039 = vld [vmem:[%s3 + $0x20] sm:$0xff]
    %v1040 = vld [vmem:[%s3 + $0x28] sm:$0xff]
    %v1041 = vld [vmem:[%s3 + $0x30] sm:$0xff]
    %v1042 = vld [vmem:[%s3 + $0x38] sm:$0xff]
    %v1043 = vld [vmem:[%s3 + $0x40] sm:$0xff]
    %v1044 = vld [vmem:[%s3 + $0x48] sm:$0xff]
    %v1045 = vld [vmem:[%s3 + $0x50] sm:$0xff]
    %v1046 = vld [vmem:[%s3 + $0x58] sm:$0xff]
    %v1047 = vld [vmem:[%s3 + $0x60] sm:$0xff]
    %v1048 = vld [vmem:[%s3 + $0x68] sm:$0xff]
    %v1049 = vld [vmem:[%s3 + $0x70] sm:$0xff]
    %v1050 = vld [vmem:[%s3 + $0x78] sm:$0xff]
    %v1051 = vld [vmem:[%s3 + $0x80] sm:$0xff]
    %v1052 = vld [vmem:[%s3 + $0x88] sm:$0xff]
    %v1053 = vld [vmem:[%s3 + $0x90] sm:$0xff]
    %v1054 = vld [vmem:[%s3 + $0x98] sm:$0xff]
    %v1055 = vld [vmem:[%s3 + $0xa0] sm:$0xff]
    %v1056 = vld [vmem:[%s3 + $0xa8] sm:$0xff]
    %v1057 = vld [vmem:[%s3 + $0xb0] sm:$0xff]
    %v1058 = vld [vmem:[%s3 + $0xb8] sm:$0xff]
    %v1059 = vld [vmem:[%s3 + $0xc0] sm:$0xff]
    %v1060 = vld [vmem:[%s3 + $0xc8] sm:$0xff]
    %v1061 = vld [vmem:[%s3 + $0xd0] sm:$0xff]
    %v1062 = vld [vmem:[%s3 + $0xd8] sm:$0xff]
    %v1063 = vld [vmem:[%s3 + $0xe0] sm:$0xff]
    %v1064 = vld [vmem:[%s3 + $0xe8] sm:$0xff]
    %v1065 = vld [vmem:[%s3 + $0xf0] sm:$0xff]
    %v1066 = vld [vmem:[%s3 + $0xf8] sm:$0xff]
    %1067 = vmatprep.subr.mxu0 0.0
    %1068 = vmatpush1.msra.mxu0 %v1035
    %1069 = vmatprep.subr.mxu0 0.0
    %1070 = vmatpush1.msra.mxu0 %v1036
    %1071 = vmatprep.subr.mxu0 0.0
    %1072 = vmatpush1.msra.mxu0 %v1037
    %1073 = vmatprep.subr.mxu0 0.0
    %1074 = vmatpush1.msra.mxu0 %v1038
    %1075 = vmatprep.subr.mxu0 0.0
    %1076 = vmatpush1.msra.mxu0 %v1039
    %1077 = vmatprep.subr.mxu0 0.0
    %1078 = vmatpush1.msra.mxu0 %v1040
    %1079 = vmatprep.subr.mxu0 0.0
    %1080 = vmatpush1.msra.mxu0 %v1041
    %1081 = vmatprep.subr.mxu0 0.0
    %1082 = vmatpush1.msra.mxu0 %v1042
    %1083 = vmatprep.subr.mxu0 0.0
    %1084 = vmatpush1.msra.mxu0 %v1043
    %1085 = vmatprep.subr.mxu0 0.0
    %1086 = vmatpush1.msra.mxu0 %v1044
    %1087 = vmatprep.subr.mxu0 0.0
    %1088 = vmatpush1.msra.mxu0 %v1045
    %1089 = vmatprep.subr.mxu0 0.0
    %1090 = vmatpush1.msra.mxu0 %v1046
    %1091 = vmatprep.subr.mxu0 0.0
    %1092 = vmatpush1.msra.mxu0 %v1047
    %1093 = vmatprep.subr.mxu0 0.0
    %1094 = vmatpush1.msra.mxu0 %v1048
    %1095 = vmatprep.subr.mxu0 0.0
    %1096 = vmatpush1.msra.mxu0 %v1049
    %1097 = vmatprep.subr.mxu0 0.0
    %1098 = vmatpush1.msra.mxu0 %v1050
    %1099 = vmatprep.subr.mxu0 0.0
    %1100 = vmatpush1.msra.mxu0 %v1051
    %1101 = vmatprep.subr.mxu0 0.0
    %1102 = vmatpush1.msra.mxu0 %v1052
    %1103 = vmatprep.subr.mxu0 0.0
    %1104 = vmatpush1.msra.mxu0 %v1053
    %1105 = vmatprep.subr.mxu0 0.0
    %1106 = vmatpush1.msra.mxu0 %v1054
    %1107 = vmatprep.subr.mxu0 0.0
    %1108 = vmatpush1.msra.mxu0 %v1055
    %1109 = vmatprep.subr.mxu0 0.0
    %1110 = vmatpush1.msra.mxu0 %v1056
    %1111 = vmatprep.subr.mxu0 0.0
    %1112 = vmatpush1.msra.mxu0 %v1057
    %1113 = vmatprep.subr.mxu0 0.0
    %1114 = vmatpush1.msra.mxu0 %v1058
    %1115 = vmatprep.subr.mxu0 0.0
    %1116 = vmatpush1.msra.mxu0 %v1059
    %1117 = vmatprep.subr.mxu0 0.0
    %1118 = vmatpush1.msra.mxu0 %v1060
    %1119 = vmatprep.subr.mxu0 0.0
    %1120 = vmatpush1.msra.mxu0 %v1061
    %1121 = vmatprep.subr.mxu0 0.0
    %1122 = vmatpush1.msra.mxu0 %v1062
    %1123 = vmatprep.subr.mxu0 0.0
    %1124 = vmatpush1.msra.mxu0 %v1063
    %1125 = vmatprep.subr.mxu0 0.0
    %1126 = vmatpush1.msra.mxu0 %v1064
    %1127 = vmatprep.subr.mxu0 0.0
    %1128 = vmatpush1.msra.mxu0 %v1065
    %1129 = vmatprep.subr.mxu0 0.0
    %1130 = vmatpush1.msra.mxu0 %v1066
    %1131 = vmatprep.mubr.f32.mxu0 %v1034
    %1132 = vmatmul.mubr.f32.gmra.mrb[0].mxu0 %v1033
    %v1133 = vpop.f32.mrb[0].mxu0
    %v1134 = vadd.f32 0.0, %v1133
    %v1135 = vpop.f32.mrb[0].mxu0
    %1136 = vdwg.mxu0
    %v1137 = vmul.f32 %v1134, 0.00048828125
    %v1138 = vmul.f32 %v1137, %v1137
    %v1140 = vrot.slane %v1138, 7
    %v1142 = vsub.f32 %v1137, %v1140
    %v1143 = vld [vmem:[#allocation2] sm:$0x3]
    %v1144 = vadd.f32 %v1142, 1e-05
    %v1145 = vrsqrt.pop %v1144
    %v1147 = vrot.slane %v1145, 1
    %v1149 = vmul.f32 %v1143, %v1147
    %v1150 = vmul.f32 %v1137, %v1149
    %v1152 = vrot.slane %v1150, 7
    %v1154 = vsub.f32 %v1143, %v1152
    %v1155 = vsel %vm1032, %v1149, %v1154
    %v1156 = vld [vmem:[%s4] sm:$0xff]
    %v1157 = vld [vmem:[%s4 + $0x8] sm:$0xff]
    %vm1158 = vcmask 64512
    %v1160 = vsel %vm1158, %v1155, 0
    %1162 = vmatprep.subr.mxu0 %v1157
    %1163 = vmatpush1.msra.mxu0 %v1156
    %1164 = vmatprep.subr.mxu0 0.0
    %1165 = vmatpush1.msra.mxu0 0.0
    %1166 = vmatprep.subr.mxu0 0.0
    %1167 = vmatpush1.msra.mxu0 0.0
    %1168 = vmatprep.subr.mxu0 0.0
    %1169 = vmatpush1.msra.mxu0 0.0
    %1170 = vmatprep.subr.mxu0 0.0
    %1171 = vmatpush1.msra.mxu0 0.0
    %1172 = vmatprep.subr.mxu0 0.0
    %1173 = vmatpush1.msra.mxu0 0.0
    %1174 = vmatprep.subr.mxu0 0.0
    %1175 = vmatpush1.msra.mxu0 0.0
    %1176 = vmatprep.subr.mxu0 0.0
    %1177 = vmatpush1.msra.mxu0 0.0
    %1178 = vmatprep.subr.mxu0 0.0
    %1179 = vmatpush1.msra.mxu0 0.0
    %1180 = vmatprep.subr.mxu0 0.0
    %1181 = vmatpush1.msra.mxu0 0.0
    %1182 = vmatprep.subr.mxu0 0.0
    %1183 = vmatpush1.msra.mxu0 0.0
    %1184 = vmatprep.subr.mxu0 0.0
    %1185 = vmatpush1.msra.mxu0 0.0
    %1186 = vmatprep.subr.mxu0 0.0
    %1187 = vmatpush1.msra.mxu0 0.0
    %1188 = vmatprep.subr.mxu0 0.0
    %1189 = vmatpush1.msra.mxu0 0.0
    %1190 = vmatprep.subr.mxu0 0.0
    %1191 = vmatpush1.msra.mxu0 0.0
    %1192 = vmatprep.subr.mxu0 0.0
    %1193 = vmatpush1.msra.mxu0 0.0
    %1194 = vmatprep.subr.mxu0 0.0
    %1195 = vmatpush1.msra.mxu0 0.0
    %1196 = vmatprep.subr.mxu0 0.0
    %1197 = vmatpush1.msra.mxu0 0.0
    %1198 = vmatprep.subr.mxu0 0.0
    %1199 = vmatpush1.msra.mxu0 0.0
    %1200 = vmatprep.subr.mxu0 0.0
    %1201 = vmatpush1.msra.mxu0 0.0
    %1202 = vmatprep.subr.mxu0 0.0
    %1203 = vmatpush1.msra.mxu0 0.0
    %1204 = vmatprep.subr.mxu0 0.0
    %1205 = vmatpush1.msra.mxu0 0.0
    %1206 = vmatprep.subr.mxu0 0.0
    %1207 = vmatpush1.msra.mxu0 0.0
    %1208 = vmatprep.subr.mxu0 0.0
    %1209 = vmatpush1.msra.mxu0 0.0
    %1210 = vmatprep.subr.mxu0 0.0
    %1211 = vmatpush1.msra.mxu0 0.0
    %1212 = vmatprep.subr.mxu0 0.0
    %1213 = vmatpush1.msra.mxu0 0.0
    %1214 = vmatprep.subr.mxu0 0.0
    %1215 = vmatpush1.msra.mxu0 0.0
    %1216 = vmatprep.subr.mxu0 0.0
    %1217 = vmatpush1.msra.mxu0 0.0
    %1218 = vmatprep.subr.mxu0 0.0
    %1219 = vmatpush1.msra.mxu0 0.0
    %1220 = vmatprep.subr.mxu0 0.0
    %1221 = vmatpush1.msra.mxu0 0.0
    %1222 = vmatprep.subr.mxu0 0.0
    %1223 = vmatpush1.msra.mxu0 0.0
    %1224 = vmatprep.subr.mxu0 0.0
    %1225 = vmatpush1.msra.mxu0 0.0
    %1226 = vmatprep.mubr.f32.mxu0 0.0
    %1227 = vmatmul.mubr.f32.gmra.mrb[0].mxu0 %v1160
    %v1228 = vpop.f32.mrb[0].mxu0
    %v1229 = vadd.f32 0.0, %v1228
    %v1230 = vpop.f32.mrb[0].mxu0
    %v1231 = vadd.f32 0.0, %v1230
    %1232 = vdwg.mxu0
    %v1233 = vlaneseq
    %v1234 = vshrl.u32 %v1233, 7
    %v1235 = vsub.s32 0, %v1234
    %v1236 = vrot.slane %v1229, %v1235
    %v1237 = vlaneseq
    %v1238 = vshrl.u32 %v1237, 7
    %v1239 = vsub.s32 0, %v1238
    %v1240 = vrot.slane %v1231, %v1239
    %v1241 = vmul.f32 %v918, %v1236
    %v1242 = vmul.f32 %v920, %v1240
    %v1243 = vmul.f32 %v924, %v1236
    %v1244 = vmul.f32 %v926, %v1240
    %v1245 = vmul.f32 %v930, %v1236
    %v1246 = vmul.f32 %v932, %v1240
    %v1247 = vmul.f32 %v936, %v1236
    %v1248 = vmul.f32 %v938, %v1240
    %v1249 = vmul.f32 %v942, %v1236
    %v1250 = vmul.f32 %v944, %v1240
    %v1251 = vmul.f32 %v948, %v1236
    %v1252 = vmul.f32 %v950, %v1240
    %v1253 = vmul.f32 %v954, %v1236
    %v1254 = vmul.f32 %v956, %v1240
    %v1255 = vmul.f32 %v960, %v1236
    %v1256 = vmul.f32 %v962, %v1240
    %v1257 = vlaneseq
    %v1258 = vshrl.u32 %v1257, 7
    %v1259 = vsub.s32 1, %v1258
    %v1260 = vrot.slane %v1229, %v1259
    %v1261 = vlaneseq
    %v1262 = vshrl.u32 %v1261, 7
    %v1263 = vsub.s32 1, %v1262
    %v1264 = vrot.slane %v1231, %v1263
    %v1265 = vadd.f32 %v1241, %v1260
    %v1266 = vadd.f32 %v1242, %v1264
    %v1267 = vadd.f32 %v1243, %v1260
    %v1268 = vadd.f32 %v1244, %v1264
    %v1269 = vadd.f32 %v1245, %v1260
    %v1270 = vadd.f32 %v1246, %v1264
    %v1271 = vadd.f32 %v1247, %v1260
    %v1272 = vadd.f32 %v1248, %v1264
    %v1273 = vadd.f32 %v1249, %v1260
    %v1274 = vadd.f32 %v1250, %v1264
    %v1275 = vadd.f32 %v1251, %v1260
    %v1276 = vadd.f32 %v1252, %v1264
    %v1277 = vadd.f32 %v1253, %v1260
    %v1278 = vadd.f32 %v1254, %v1264
    %v1279 = vadd.f32 %v1255, %v1260
    %v1280 = vadd.f32 %v1256, %v1264
    %1281 = vst [vmem:[%s6] sm:$0xff] %v1265
    %1282 = vst [vmem:[%s6 + $0x8] sm:$0xff] %v1266
    %1283 = vst [vmem:[%s6 + $0x10] sm:$0xff] %v1267
    %1284 = vst [vmem:[%s6 + $0x18] sm:$0xff] %v1268
    %1285 = vst [vmem:[%s6 + $0x20] sm:$0xff] %v1269
    %1286 = vst [vmem:[%s6 + $0x28] sm:$0xff] %v1270
    %1287 = vst [vmem:[%s6 + $0x30] sm:$0xff] %v1271
    %1288 = vst [vmem:[%s6 + $0x38] sm:$0xff] %v1272
    %1289 = vst [vmem:[%s6 + $0x40] sm:$0xff] %v1273
    %1290 = vst [vmem:[%s6 + $0x48] sm:$0xff] %v1274
    %1291 = vst [vmem:[%s6 + $0x50] sm:$0xff] %v1275
    %1292 = vst [vmem:[%s6 + $0x58] sm:$0xff] %v1276
    %1293 = vst [vmem:[%s6 + $0x60] sm:$0xff] %v1277
    %1294 = vst [vmem:[%s6 + $0x68] sm:$0xff] %v1278
    %1295 = vst [vmem:[%s6 + $0x70] sm:$0xff] %v1279
    %1296 = vst [vmem:[%s6 + $0x78] sm:$0xff] %v1280
    // Predicated region
    $region30: #{upsample_forward.1} parent=1 // pred_check
      _
    $region31: #{upsample_forward.1} parent=1 // pred_check_branch
      %1298 = sbr.rel (0) target = $region33
    $region32: #{upsample_forward.1} parent=1 // pred_region
      _
    $region33: #{upsample_forward.1} parent=1 // pred_fallthru
      _
    // Predicated region
    $region34: #{upsample_forward.1} parent=1 // pred_check
      _
    $region35: #{upsample_forward.1} parent=1 // pred_check_branch
      %1300 = sbr.rel (0) target = $region37
    $region36: #{upsample_forward.1} parent=1 // pred_region
      _
    $region37: #{upsample_forward.1} parent=1 // pred_fallthru
      _
    %1301 = vsyncpa [#allocation3], 1

</llo_original>
